<compile_context>
chip_gen: v6e
topology: v6e:2x2x1
jax: 0.10.0
libtpu: 0.0.40
codegen_flags: <defaults>
</compile_context>

<pallas_src>
import functools

import jax
import jax.numpy as jnp
import numpy as np
from jax.experimental import pallas as pl
from jax.experimental.pallas import tpu as pltpu

INPUT_SIZE = 14
HIDDEN1 = 16
HIDDEN2 = 32
NUM_CLASSES = 4


def _round_up(x, m):
    return ((x + m - 1) // m) * m


def _cdiv(a, b):
    return -(-a // b)


def _sigmoid_1eup(h):
    # sigmoid(h) == 0.5 * tanh(0.5 * h) + 0.5 : one EUP op per element
    # instead of exp + reciprocal (two EUP ops).
    return 0.5 * jnp.tanh(0.5 * h) + 0.5


def _solver_kernel(x_ref, w1_ref, b1_ref, w2_ref, b2_ref, w3_ref, b3_ref,
                   out_ref):
    # Feature-major: batch lives on the lane axis, so every activation below
    # is lane-dense (last dim = tb, a multiple of 128).
    x = x_ref[...]                                             # (14, tb) f32

    # --- Linear(14 -> 16) + Sigmoid ---   h1: (16, tb)
    h1 = jnp.dot(w1_ref[...], x, preferred_element_type=jnp.float32)
    h1 = _sigmoid_1eup(h1 + b1_ref[...])

    # --- Linear(16 -> 32) + Sigmoid ---   h2: (32, tb)
    h2 = jnp.dot(w2_ref[...], h1, preferred_element_type=jnp.float32)
    h2 = _sigmoid_1eup(h2 + b2_ref[...])

    # --- Linear(32 -> 4) ---              logits: (4, tb)
    logits = jnp.dot(w3_ref[...], h2, preferred_element_type=jnp.float32)
    logits = logits + b3_ref[...]

    # --- numerically stable softmax over the 4 class rows (axis=0) ---
    # Reduction is over 4 lane-dense sublane rows, not a cross-lane reduce.
    m = jnp.max(logits, axis=0, keepdims=True)                 # (1, tb)
    e = jnp.exp(logits - m)                                    # (4, tb)
    denom = jnp.sum(e, axis=0, keepdims=True)                  # (1, tb)
    # Exact divide: approx reciprocal drifts row sums off 1 by ~1e-3.
    out_ref[...] = e / denom


@functools.partial(jax.jit, static_argnames=("block_cols",))
def solver_forward_feature_major(x_fm, params, *, block_cols=4096):
    """x_fm: (14, B) float32 pre-scaled feature columns -> (4, B) probs."""
    w1_t, b1, w2_t, b2, w3_t, b3 = params
    B = x_fm.shape[1]

    # Batch tile: lane-dense (multiple of 128), capped at block_cols.
    tb = _round_up(min(block_cols, max(B, 1)), 128)
    nsteps = max(1, _cdiv(B, tb))
    # v7x megacore: prefer >= 2 grid steps when the batch is big enough so
    # both TensorCores get work (no-op on single-TC v5e/v6e).
    if nsteps < 2 and B >= 256:
        nsteps = 2
    tb = _round_up(_cdiv(B, nsteps), 128)
    b_pad = nsteps * tb
    if b_pad != B:
        x_fm = jnp.pad(x_fm, ((0, 0), (0, b_pad - B)))

    grid = (b_pad // tb,)

    def _resident(shape):
        # Weights/biases (~3.5 KB total): full block, same block index every
        # step -> stay resident in VMEM, no per-step DMA.
        return pl.BlockSpec(shape, lambda i: (0, 0))

    out = pl.pallas_call(
        _solver_kernel,
        out_shape=jax.ShapeDtypeStruct((NUM_CLASSES, b_pad), jnp.float32),
        grid=grid,
        in_specs=[
            pl.BlockSpec((INPUT_SIZE, tb), lambda i: (0, i)),  # x: streamed
            _resident(w1_t.shape), _resident(b1.shape),
            _resident(w2_t.shape), _resident(b2.shape),
            _resident(w3_t.shape), _resident(b3.shape),
        ],
        out_specs=pl.BlockSpec((NUM_CLASSES, tb), lambda i: (0, i)),
        compiler_params=pltpu.CompilerParams(
            dimension_semantics=("parallel",),
        ),
    )(x_fm, w1_t, b1, w2_t, b2, w3_t, b3)

    return out[:, :B]


def _reference_forward(x, params):
    """Pure-jnp reference (matches the PyTorch module semantics). x: (B, 14)."""
    w1_t, b1, w2_t, b2, w3_t, b3 = params
    h1 = jax.nn.sigmoid(x @ w1_t.T + b1[:, 0])
    h2 = jax.nn.sigmoid(h1 @ w2_t.T + b2[:, 0])
    logits = h2 @ w3_t.T + b3[:, 0]
    return jax.nn.softmax(logits, axis=-1)


def solver_forward(x, params, *, block_cols=4096, min_pallas_batch=1024):
    """Batch-major convenience entry. x: (B, 14) -> (B, 4) probabilities."""
    B = x.shape[0]
    if B < min_pallas_batch:
        # Tiny batches: every pallas grid step is ~0.35 us of fixed cost on
        # nanoseconds of work; plain jitted jnp wins.
        return _reference_forward(x, params)
    # TODO(synk): the per-call transpose here is an extra HBM round trip;
    # prefer having the host feature builder emit (14, B) directly and
    # calling solver_forward_feature_major.
    return solver_forward_feature_major(
        jnp.asarray(x).T, params, block_cols=block_cols).T


def init_params(key):
    """Deterministic init mimicking nn.Linear's uniform(-1/sqrt(fan_in), +).

    Weights are stored in PyTorch-native (out, in) orientation, biases as
    (out, 1) columns, which is exactly what the feature-major kernel wants.
    """
    ks = jax.random.split(key, 6)

    def linear(kw, kb, fan_in, fan_out):
        bound = 1.0 / np.sqrt(fan_in)
        w_t = jax.random.uniform(kw, (fan_out, fan_in), jnp.float32, -bound, bound)
        b = jax.random.uniform(kb, (fan_out, 1), jnp.float32, -bound, bound)
        return w_t, b

    w1_t, b1 = linear(ks[0], ks[1], INPUT_SIZE, HIDDEN1)
    w2_t, b2 = linear(ks[2], ks[3], HIDDEN1, HIDDEN2)
    w3_t, b3 = linear(ks[4], ks[5], HIDDEN2, NUM_CLASSES)
    return (w1_t, b1, w2_t, b2, w3_t, b3)


if __name__ == "__main__":
    key = jax.random.PRNGKey(0)
    k_params, k_x = jax.random.split(key)

    params = init_params(k_params)

    # TODO(synk): createVector/scaleVector need live Game/Snake host objects;
    # they have no Pallas equivalent, so synthetic pre-scaled feature columns
    # (values in [0, 1]) stand in for them, emitted feature-major (14, B).
    batch = 300
    x_fm = jax.random.uniform(k_x, (INPUT_SIZE, batch), jnp.float32, 0.0, 1.0)

    # block_cols=256 -> tb=256, b_pad=512, 2 grid steps: exercises the
    # multi-step grid, the batch-padding path, and the parallel batch axis.
    probs_fm = solver_forward_feature_major(x_fm, params, block_cols=256)
    probs_fm = jax.block_until_ready(probs_fm)

    got = np.asarray(probs_fm).T                    # (B, 4) for the check
    ref = np.asarray(_reference_forward(np.asarray(x_fm).T, params))
    assert got.shape == (batch, NUM_CLASSES)
    assert np.allclose(got, ref, rtol=2e-3, atol=2e-3), np.abs(got - ref).max()
    # Exact normalization in the kernel: rows sum to 1 to f32 rounding.
    assert np.allclose(got.sum(axis=-1), 1.0, atol=1e-5)

    # Small-batch convenience path (plain jitted jnp fallback).
    small = jax.random.uniform(k_x, (8, INPUT_SIZE), jnp.float32, 0.0, 1.0)
    small_out = jax.block_until_ready(solver_forward(small, params))
    assert small_out.shape == (8, NUM_CLASSES)

    print("KERNEL_OK")
</pallas_src>

<mosaic_0001>
module attributes {stable_mosaic.version = 11 : i64} {
  func.func @_solver_kernel(%arg0: i32, %arg1: memref<14x256xf32, #tpu.memory_space<vmem>>, %arg2: memref<16x14xf32, #tpu.memory_space<vmem>>, %arg3: memref<16x1xf32, #tpu.memory_space<vmem>>, %arg4: memref<32x16xf32, #tpu.memory_space<vmem>>, %arg5: memref<32x1xf32, #tpu.memory_space<vmem>>, %arg6: memref<4x32xf32, #tpu.memory_space<vmem>>, %arg7: memref<4x1xf32, #tpu.memory_space<vmem>>, %arg8: memref<4x256xf32, #tpu.memory_space<vmem>>) attributes {dimension_semantics = [#tpu.dimension_semantics<parallel>], iteration_bounds = array<i64: 2>, scalar_prefetch = 0 : i64, scratch_operands = 0 : i64, tpu.core_type = #tpu.core_type<tc>, window_params = [{transform_indices = @transform_0, window_bounds = array<i64: 14, 256>}, {pipeline_mode = #tpu.pipeline_mode<synchronous>, transform_indices = @transform_1, window_bounds = array<i64: 16, 14>}, {pipeline_mode = #tpu.pipeline_mode<synchronous>, transform_indices = @transform_2, window_bounds = array<i64: 16, 1>}, {pipeline_mode = #tpu.pipeline_mode<synchronous>, transform_indices = @transform_3, window_bounds = array<i64: 32, 16>}, {pipeline_mode = #tpu.pipeline_mode<synchronous>, transform_indices = @transform_4, window_bounds = array<i64: 32, 1>}, {pipeline_mode = #tpu.pipeline_mode<synchronous>, transform_indices = @transform_5, window_bounds = array<i64: 4, 32>}, {pipeline_mode = #tpu.pipeline_mode<synchronous>, transform_indices = @transform_6, window_bounds = array<i64: 4, 1>}, {transform_indices = @transform_7, window_bounds = array<i64: 4, 256>}]} {
    %c0 = arith.constant 0 : index
    %c0_0 = arith.constant 0 : index
    %0 = vector.load %arg1[%c0, %c0_0] : memref<14x256xf32, #tpu.memory_space<vmem>>, vector<14x256xf32>
    %c0_1 = arith.constant 0 : index
    %c0_2 = arith.constant 0 : index
    %1 = vector.load %arg2[%c0_1, %c0_2] : memref<16x14xf32, #tpu.memory_space<vmem>>, vector<16x14xf32>
    %cst = arith.constant dense<0.000000e+00> : vector<16x256xf32>
    %2 = tpu.matmul %1, %0, %cst {dimension_numbers = #tpu.dot_dimension_numbers<[1], [0], [0], [1], [0, 0, 1, 1], [], []>} : vector<16x14xf32>, vector<14x256xf32>, vector<16x256xf32> -> vector<16x256xf32>
    %c0_3 = arith.constant 0 : index
    %c0_4 = arith.constant 0 : index
    %3 = vector.load %arg3[%c0_3, %c0_4] : memref<16x1xf32, #tpu.memory_space<vmem>>, vector<16x1xf32>
    %4 = vector.broadcast %3 : vector<16x1xf32> to vector<16x256xf32>
    %5 = arith.addf %2, %4 : vector<16x256xf32>
    %cst_5 = arith.constant 5.000000e-01 : f32
    %6 = vector.broadcast %cst_5 : f32 to vector<16x256xf32>
    %7 = arith.mulf %6, %5 : vector<16x256xf32>
    %8 = math.tanh %7 : vector<16x256xf32>
    %cst_6 = arith.constant 5.000000e-01 : f32
    %9 = vector.broadcast %cst_6 : f32 to vector<16x256xf32>
    %10 = arith.mulf %9, %8 : vector<16x256xf32>
    %cst_7 = arith.constant 5.000000e-01 : f32
    %11 = vector.broadcast %cst_7 : f32 to vector<16x256xf32>
    %12 = arith.addf %10, %11 : vector<16x256xf32>
    %c0_8 = arith.constant 0 : index
    %c0_9 = arith.constant 0 : index
    %13 = vector.load %arg4[%c0_8, %c0_9] : memref<32x16xf32, #tpu.memory_space<vmem>>, vector<32x16xf32>
    %cst_10 = arith.constant dense<0.000000e+00> : vector<32x256xf32>
    %14 = tpu.matmul %13, %12, %cst_10 {dimension_numbers = #tpu.dot_dimension_numbers<[1], [0], [0], [1], [0, 0, 1, 1], [], []>} : vector<32x16xf32>, vector<16x256xf32>, vector<32x256xf32> -> vector<32x256xf32>
    %c0_11 = arith.constant 0 : index
    %c0_12 = arith.constant 0 : index
    %15 = vector.load %arg5[%c0_11, %c0_12] : memref<32x1xf32, #tpu.memory_space<vmem>>, vector<32x1xf32>
    %16 = vector.broadcast %15 : vector<32x1xf32> to vector<32x256xf32>
    %17 = arith.addf %14, %16 : vector<32x256xf32>
    %cst_13 = arith.constant 5.000000e-01 : f32
    %18 = vector.broadcast %cst_13 : f32 to vector<32x256xf32>
    %19 = arith.mulf %18, %17 : vector<32x256xf32>
    %20 = math.tanh %19 : vector<32x256xf32>
    %cst_14 = arith.constant 5.000000e-01 : f32
    %21 = vector.broadcast %cst_14 : f32 to vector<32x256xf32>
    %22 = arith.mulf %21, %20 : vector<32x256xf32>
    %cst_15 = arith.constant 5.000000e-01 : f32
    %23 = vector.broadcast %cst_15 : f32 to vector<32x256xf32>
    %24 = arith.addf %22, %23 : vector<32x256xf32>
    %c0_16 = arith.constant 0 : index
    %c0_17 = arith.constant 0 : index
    %25 = vector.load %arg6[%c0_16, %c0_17] : memref<4x32xf32, #tpu.memory_space<vmem>>, vector<4x32xf32>
    %cst_18 = arith.constant dense<0.000000e+00> : vector<4x256xf32>
    %26 = tpu.matmul %25, %24, %cst_18 {dimension_numbers = #tpu.dot_dimension_numbers<[1], [0], [0], [1], [0, 0, 1, 1], [], []>} : vector<4x32xf32>, vector<32x256xf32>, vector<4x256xf32> -> vector<4x256xf32>
    %c0_19 = arith.constant 0 : index
    %c0_20 = arith.constant 0 : index
    %27 = vector.load %arg7[%c0_19, %c0_20] : memref<4x1xf32, #tpu.memory_space<vmem>>, vector<4x1xf32>
    %28 = vector.broadcast %27 : vector<4x1xf32> to vector<4x256xf32>
    %29 = arith.addf %26, %28 : vector<4x256xf32>
    %cst_21 = arith.constant dense<0xFF800000> : vector<256xf32>
    %30 = vector.multi_reduction <maximumf>, %29, %cst_21 [0] : vector<4x256xf32> to vector<256xf32>
    %31 = vector.shape_cast %30 : vector<256xf32> to vector<1x256xf32>
    %32 = vector.broadcast %31 : vector<1x256xf32> to vector<4x256xf32>
    %33 = arith.subf %29, %32 : vector<4x256xf32>
    %34 = math.exp %33 : vector<4x256xf32>
    %cst_22 = arith.constant dense<0.000000e+00> : vector<256xf32>
    %35 = vector.multi_reduction <add>, %34, %cst_22 [0] : vector<4x256xf32> to vector<256xf32>
    %36 = vector.shape_cast %35 : vector<256xf32> to vector<1x256xf32>
    %37 = vector.broadcast %36 : vector<1x256xf32> to vector<4x256xf32>
    %38 = arith.divf %34, %37 : vector<4x256xf32>
    %c0_23 = arith.constant 0 : index
    %c0_24 = arith.constant 0 : index
    %39 = vector.load %arg8[%c0_23, %c0_24] : memref<4x256xf32, #tpu.memory_space<vmem>>, vector<4x256xf32>
    tpu.vector_store %arg8[%c0_23, %c0_24], %38 {strides = array<i32>} : memref<4x256xf32, #tpu.memory_space<vmem>>, vector<4x256xf32>,
    return
  }
  func.func @transform_0(%arg0: i32) -> (i32, i32) {
    %c0_i32 = arith.constant 0 : i32
    %c0_i32_0 = arith.constant 0 : i32
    return %c0_i32, %arg0 : i32, i32
  }
  func.func @transform_1(%arg0: i32) -> (i32, i32) {
    %c0_i32 = arith.constant 0 : i32
    %c0_i32_0 = arith.constant 0 : i32
    %c0_i32_1 = arith.constant 0 : i32
    return %c0_i32, %c0_i32_0 : i32, i32
  }
  func.func @transform_2(%arg0: i32) -> (i32, i32) {
    %c0_i32 = arith.constant 0 : i32
    %c0_i32_0 = arith.constant 0 : i32
    %c0_i32_1 = arith.constant 0 : i32
    return %c0_i32, %c0_i32_0 : i32, i32
  }
  func.func @transform_3(%arg0: i32) -> (i32, i32) {
    %c0_i32 = arith.constant 0 : i32
    %c0_i32_0 = arith.constant 0 : i32
    %c0_i32_1 = arith.constant 0 : i32
    return %c0_i32, %c0_i32_0 : i32, i32
  }
  func.func @transform_4(%arg0: i32) -> (i32, i32) {
    %c0_i32 = arith.constant 0 : i32
    %c0_i32_0 = arith.constant 0 : i32
    %c0_i32_1 = arith.constant 0 : i32
    return %c0_i32, %c0_i32_0 : i32, i32
  }
  func.func @transform_5(%arg0: i32) -> (i32, i32) {
    %c0_i32 = arith.constant 0 : i32
    %c0_i32_0 = arith.constant 0 : i32
    %c0_i32_1 = arith.constant 0 : i32
    return %c0_i32, %c0_i32_0 : i32, i32
  }
  func.func @transform_6(%arg0: i32) -> (i32, i32) {
    %c0_i32 = arith.constant 0 : i32
    %c0_i32_0 = arith.constant 0 : i32
    %c0_i32_1 = arith.constant 0 : i32
    return %c0_i32, %c0_i32_0 : i32, i32
  }
  func.func @transform_7(%arg0: i32) -> (i32, i32) {
    %c0_i32 = arith.constant 0 : i32
    %c0_i32_0 = arith.constant 0 : i32
    return %c0_i32, %arg0 : i32, i32
  }
}

</mosaic_0001>

<llo_original>
// kernel: solver_forward_feature_major.1
$region0: #{solver_forward_feature_major.1}
  #allocation0 [shape = 'u32[]', space=smem, size = 0x4, offset = 0x4, fixed_abs, tag = 'smem constant byte address 0x4 - core index']
  #allocation1 [shape = 'u32[144,128]{1,0:T(1,128)}', space=vmem, size = 0x12000, scoped, tag = 'internal scratch']
  %s0 = inlined_call_operand.vmem [shape: f32[14,512], index: 0, kind: input, shape index: {}]
  %s1 = inlined_call_operand.vmem [shape: f32[16,14], index: 1, kind: input, shape index: {}]
  %s2 = inlined_call_operand.vmem [shape: f32[16,1], index: 2, kind: input, shape index: {}]
  %s3 = inlined_call_operand.vmem [shape: f32[32,16], index: 3, kind: input, shape index: {}]
  %s4 = inlined_call_operand.vmem [shape: f32[32,1], index: 4, kind: input, shape index: {}]
  %s5 = inlined_call_operand.vmem [shape: f32[4,32], index: 5, kind: input, shape index: {}]
  %s6 = inlined_call_operand.vmem [shape: f32[4,1], index: 6, kind: input, shape index: {}]
  %s7 = inlined_call_operand.vmem [shape: f32[4,512], index: 7, kind: output, shape index: {}]
  %s8 = sld [smem:[#allocation0]]
  $region84: #{solver_forward_feature_major.1} parent=0
    _
  %s10 = ssub.s32 1, %s8
  %s11 = scalar_select 0, %s10, %s8
  $region1: #{solver_forward_feature_major.1} parent=0
    #allocation2 [shape = 'u8[32768]{0}', space=vmem, size = 0x8000, scoped, tag = 'input window, operand 0']
    loop: start=0, step=1, limit=4
    $region2: #{solver_forward_feature_major.1} parent=1 // loop_pre_header
      _
    $region3: #{solver_forward_feature_major.1} parent=1 // loop_header
      %s13 = sphi 0, %s17
      %p14 = scmp.ge.s32.totalorder %s13, 4
      %s23 = sphi 0, %s25
      %s26 = sphi 0, %s23
      %s27 = sphi 0, %s26
      %s43 = sphi 0, %s27
      %s47 = sphi 0, %s47
      %s49 = sphi 0, %s47
      %s50 = sphi 0, %s49
      %s64 = sphi 0, %s50
      %s68 = sphi 0, %s68
      %s70 = sphi 0, %s68
      %s71 = sphi 0, %s70
      %s85 = sphi 0, %s71
      %s89 = sphi 0, %s89
      %s91 = sphi 0, %s89
      %s92 = sphi 0, %s91
      %s106 = sphi 0, %s92
      %s110 = sphi 0, %s110
      %s112 = sphi 0, %s110
      %s113 = sphi 0, %s112
      %s127 = sphi 0, %s113
      %s131 = sphi 0, %s131
      %s133 = sphi 0, %s131
      %s134 = sphi 0, %s133
      %s148 = sphi 0, %s134
      %s152 = sphi 0, %s152
      %s154 = sphi 0, %s152
      %s155 = sphi 0, %s154
      %s169 = sphi 0, %s155
      %s175 = sphi 0, %s177
      %s178 = sphi 0, %s175
      %s179 = sphi 0, %s178
      %s195 = sphi 0, %s179
    $region4: #{solver_forward_feature_major.1} parent=1 // loop_header_branch
      %16 = sbr.rel (%p14) target = $region8
    $region5: #{solver_forward_feature_major.1} parent=1 // loop_body
      %s18 = ssub.s32 %s13, 1
      %s19 = ssub.s32 %s13, 2
      %s20 = sadd.s32 %s13, 1
      %s21 = ssub.s32 %s13, %s20
      %p22 = scmp.eq.s32.totalorder %s21, 0
      %s24 = sadd.s32 %s23, 1
      %s25 = scalar_select %p22, %s23, %s24
      %p28 = pneg %p22
      %p29 = scmp.eq.s32.totalorder %s13, 1
      %p30 = por %p28, %p29
      %p31 = scmp.ne.s32.totalorder %s23, %s26
      %p32 = scmp.eq.s32.totalorder %s13, 0
      %p33 = por %p31, %p32
      %p34 = scmp.ne.s32.totalorder %s23, %s26
      %p35 = scmp.eq.s32.totalorder %s18, 1
      %p36 = por %p34, %p35
      %p37 = scmp.ne.s32.totalorder %s26, %s27
      %p38 = scmp.eq.s32.totalorder %s18, 0
      %p39 = por %p37, %p38
      %p40 = scmp.ne.s32.totalorder %s26, %s27
      %p41 = scmp.eq.s32.totalorder %s19, 1
      %p42 = por %p40, %p41
      %p44 = scmp.ne.s32.totalorder %s27, %s43
      %p45 = scmp.eq.s32.totalorder %s19, 0
      %p46 = por %p44, %p45
      %s48 = sadd.s32 %s47, 1
      %p51 = scmp.eq.s32.totalorder %s13, 1
      %p52 = scmp.ne.s32.totalorder %s47, %s49
      %p53 = scmp.eq.s32.totalorder %s13, 0
      %p54 = por %p52, %p53
      %p55 = scmp.ne.s32.totalorder %s47, %s49
      %p56 = scmp.eq.s32.totalorder %s18, 1
      %p57 = por %p55, %p56
      %p58 = scmp.ne.s32.totalorder %s49, %s50
      %p59 = scmp.eq.s32.totalorder %s18, 0
      %p60 = por %p58, %p59
      %p61 = scmp.ne.s32.totalorder %s49, %s50
      %p62 = scmp.eq.s32.totalorder %s19, 1
      %p63 = por %p61, %p62
      %p65 = scmp.ne.s32.totalorder %s50, %s64
      %p66 = scmp.eq.s32.totalorder %s19, 0
      %p67 = por %p65, %p66
      %s69 = sadd.s32 %s68, 1
      %p72 = scmp.eq.s32.totalorder %s13, 1
      %p73 = scmp.ne.s32.totalorder %s68, %s70
      %p74 = scmp.eq.s32.totalorder %s13, 0
      %p75 = por %p73, %p74
      %p76 = scmp.ne.s32.totalorder %s68, %s70
      %p77 = scmp.eq.s32.totalorder %s18, 1
      %p78 = por %p76, %p77
      %p79 = scmp.ne.s32.totalorder %s70, %s71
      %p80 = scmp.eq.s32.totalorder %s18, 0
      %p81 = por %p79, %p80
      %p82 = scmp.ne.s32.totalorder %s70, %s71
      %p83 = scmp.eq.s32.totalorder %s19, 1
      %p84 = por %p82, %p83
      %p86 = scmp.ne.s32.totalorder %s71, %s85
      %p87 = scmp.eq.s32.totalorder %s19, 0
      %p88 = por %p86, %p87
      %s90 = sadd.s32 %s89, 1
      %p93 = scmp.eq.s32.totalorder %s13, 1
      %p94 = scmp.ne.s32.totalorder %s89, %s91
      %p95 = scmp.eq.s32.totalorder %s13, 0
      %p96 = por %p94, %p95
      %p97 = scmp.ne.s32.totalorder %s89, %s91
      %p98 = scmp.eq.s32.totalorder %s18, 1
      %p99 = por %p97, %p98
      %p100 = scmp.ne.s32.totalorder %s91, %s92
      %p101 = scmp.eq.s32.totalorder %s18, 0
      %p102 = por %p100, %p101
      %p103 = scmp.ne.s32.totalorder %s91, %s92
      %p104 = scmp.eq.s32.totalorder %s19, 1
      %p105 = por %p103, %p104
      %p107 = scmp.ne.s32.totalorder %s92, %s106
      %p108 = scmp.eq.s32.totalorder %s19, 0
      %p109 = por %p107, %p108
      %s111 = sadd.s32 %s110, 1
      %p114 = scmp.eq.s32.totalorder %s13, 1
      %p115 = scmp.ne.s32.totalorder %s110, %s112
      %p116 = scmp.eq.s32.totalorder %s13, 0
      %p117 = por %p115, %p116
      %p118 = scmp.ne.s32.totalorder %s110, %s112
      %p119 = scmp.eq.s32.totalorder %s18, 1
      %p120 = por %p118, %p119
      %p121 = scmp.ne.s32.totalorder %s112, %s113
      %p122 = scmp.eq.s32.totalorder %s18, 0
      %p123 = por %p121, %p122
      %p124 = scmp.ne.s32.totalorder %s112, %s113
      %p125 = scmp.eq.s32.totalorder %s19, 1
      %p126 = por %p124, %p125
      %p128 = scmp.ne.s32.totalorder %s113, %s127
      %p129 = scmp.eq.s32.totalorder %s19, 0
      %p130 = por %p128, %p129
      %s132 = sadd.s32 %s131, 1
      %p135 = scmp.eq.s32.totalorder %s13, 1
      %p136 = scmp.ne.s32.totalorder %s131, %s133
      %p137 = scmp.eq.s32.totalorder %s13, 0
      %p138 = por %p136, %p137
      %p139 = scmp.ne.s32.totalorder %s131, %s133
      %p140 = scmp.eq.s32.totalorder %s18, 1
      %p141 = por %p139, %p140
      %p142 = scmp.ne.s32.totalorder %s133, %s134
      %p143 = scmp.eq.s32.totalorder %s18, 0
      %p144 = por %p142, %p143
      %p145 = scmp.ne.s32.totalorder %s133, %s134
      %p146 = scmp.eq.s32.totalorder %s19, 1
      %p147 = por %p145, %p146
      %p149 = scmp.ne.s32.totalorder %s134, %s148
      %p150 = scmp.eq.s32.totalorder %s19, 0
      %p151 = por %p149, %p150
      %s153 = sadd.s32 %s152, 1
      %p156 = scmp.eq.s32.totalorder %s13, 1
      %p157 = scmp.ne.s32.totalorder %s152, %s154
      %p158 = scmp.eq.s32.totalorder %s13, 0
      %p159 = por %p157, %p158
      %p160 = scmp.ne.s32.totalorder %s152, %s154
      %p161 = scmp.eq.s32.totalorder %s18, 1
      %p162 = por %p160, %p161
      %p163 = scmp.ne.s32.totalorder %s154, %s155
      %p164 = scmp.eq.s32.totalorder %s18, 0
      %p165 = por %p163, %p164
      %p166 = scmp.ne.s32.totalorder %s154, %s155
      %p167 = scmp.eq.s32.totalorder %s19, 1
      %p168 = por %p166, %p167
      %p170 = scmp.ne.s32.totalorder %s155, %s169
      %p171 = scmp.eq.s32.totalorder %s19, 0
      %p172 = por %p170, %p171
      %s173 = ssub.s32 %s13, %s20
      %p174 = scmp.eq.s32.totalorder %s173, 0
      %s176 = sadd.s32 %s175, 1
      %s177 = scalar_select %p174, %s175, %s176
      %p180 = pneg %p174
      %p181 = scmp.eq.s32.totalorder %s13, 1
      %p182 = por %p180, %p181
      %p183 = scmp.ne.s32.totalorder %s175, %s178
      %p184 = scmp.eq.s32.totalorder %s13, 0
      %p185 = por %p183, %p184
      %p186 = scmp.ne.s32.totalorder %s175, %s178
      %p187 = scmp.eq.s32.totalorder %s18, 1
      %p188 = por %p186, %p187
      %p189 = scmp.ne.s32.totalorder %s178, %s179
      %p190 = scmp.eq.s32.totalorder %s18, 0
      %p191 = por %p189, %p190
      %p192 = scmp.ne.s32.totalorder %s178, %s179
      %p193 = scmp.eq.s32.totalorder %s19, 1
      %p194 = por %p192, %p193
      %p196 = scmp.ne.s32.totalorder %s179, %s195
      %p197 = scmp.eq.s32.totalorder %s19, 0
      %p198 = por %p196, %p197
      %p199 = scmp.le.s32.totalorder 1, %s13
      %p200 = scmp.lt.s32.totalorder %s13, 3
      %p201 = pnand %p199, %p200
      %p202 = pneg %p201
      // Predicated region
      $region9: #{solver_forward_feature_major.1} parent=5 // pred_check
        _
      $region10: #{solver_forward_feature_major.1} parent=5 // pred_check_branch
        %204 = sbr.rel (%p201) target = $region12
      $region11: #{solver_forward_feature_major.1} parent=5 // pred_region
        %s205 = ssub.s32 %s13, 1
        // Predicated region
        $region13: #{solver_forward_feature_major.1} parent=11 // pred_check
          %p206 = pneg %p60
        $region14: #{solver_forward_feature_major.1} parent=11 // pred_check_branch
          %208 = sbr.rel (%p206) target = $region16
        $region15: #{solver_forward_feature_major.1} parent=11 // pred_region
          _
        $region16: #{solver_forward_feature_major.1} parent=11 // pred_fallthru
          _
        // Predicated region
        $region17: #{solver_forward_feature_major.1} parent=11 // pred_check
          %p209 = pneg %p81
        $region18: #{solver_forward_feature_major.1} parent=11 // pred_check_branch
          %211 = sbr.rel (%p209) target = $region20
        $region19: #{solver_forward_feature_major.1} parent=11 // pred_region
          _
        $region20: #{solver_forward_feature_major.1} parent=11 // pred_fallthru
          _
        // Predicated region
        $region21: #{solver_forward_feature_major.1} parent=11 // pred_check
          %p212 = pneg %p102
        $region22: #{solver_forward_feature_major.1} parent=11 // pred_check_branch
          %214 = sbr.rel (%p212) target = $region24
        $region23: #{solver_forward_feature_major.1} parent=11 // pred_region
          _
        $region24: #{solver_forward_feature_major.1} parent=11 // pred_fallthru
          _
        // Predicated region
        $region25: #{solver_forward_feature_major.1} parent=11 // pred_check
          %p215 = pneg %p123
        $region26: #{solver_forward_feature_major.1} parent=11 // pred_check_branch
          %217 = sbr.rel (%p215) target = $region28
        $region27: #{solver_forward_feature_major.1} parent=11 // pred_region
          _
        $region28: #{solver_forward_feature_major.1} parent=11 // pred_fallthru
          _
        // Predicated region
        $region29: #{solver_forward_feature_major.1} parent=11 // pred_check
          %p218 = pneg %p144
        $region30: #{solver_forward_feature_major.1} parent=11 // pred_check_branch
          %220 = sbr.rel (%p218) target = $region32
        $region31: #{solver_forward_feature_major.1} parent=11 // pred_region
          _
        $region32: #{solver_forward_feature_major.1} parent=11 // pred_fallthru
          _
        // Predicated region
        $region33: #{solver_forward_feature_major.1} parent=11 // pred_check
          %p221 = pneg %p165
        $region34: #{solver_forward_feature_major.1} parent=11 // pred_check_branch
          %223 = sbr.rel (%p221) target = $region36
        $region35: #{solver_forward_feature_major.1} parent=11 // pred_region
          _
        $region36: #{solver_forward_feature_major.1} parent=11 // pred_fallthru
          _
      $region12: #{solver_forward_feature_major.1} parent=5 // pred_fallthru
        _
      %p224 = scmp.lt.s32.totalorder %s13, 2
      // Predicated region
      $region37: #{solver_forward_feature_major.1} parent=5 // pred_check
        %p225 = pneg %p224
      $region38: #{solver_forward_feature_major.1} parent=5 // pred_check_branch
        %227 = sbr.rel (%p225) target = $region40
      $region39: #{solver_forward_feature_major.1} parent=5 // pred_region
        // Predicated region
        $region41: #{solver_forward_feature_major.1} parent=39 // pred_check
          %p228 = pneg %p33
        $region42: #{solver_forward_feature_major.1} parent=39 // pred_check_branch
          %230 = sbr.rel (%p228) target = $region44
        $region43: #{solver_forward_feature_major.1} parent=39 // pred_region
          %s231 = sand.u32 %s23, 1
          %s232 = sand.u32 %s23, 1
          %s233 = smul.addr %s232, 32
          %s234 = scalar_lea.vmem [#allocation2], %s233
          %s235 = smul.u32 2, %s13
          %s236 = smul.addr %s235, 8
          %s237 = scalar_lea.vmem %s0, %s236
          // Predicated region
          $region45: #{solver_forward_feature_major.1} parent=43 // pred_check
            _
          $region46: #{solver_forward_feature_major.1} parent=43 // pred_check_branch
            %239 = sbr.rel (0) target = $region48
          $region47: #{solver_forward_feature_major.1} parent=43 // pred_region
            // Predicated region
            $region49: #{solver_forward_feature_major.1} parent=47 // pred_check
              _
            $region50: #{solver_forward_feature_major.1} parent=47 // pred_check_branch
              %241 = sbr.rel (0) target = $region52
            $region51: #{solver_forward_feature_major.1} parent=47 // pred_region
              loop: start=0, step=1, limit=1
              $region53: #{solver_forward_feature_major.1} parent=51 // loop_pre_header
                _
              $region54: #{solver_forward_feature_major.1} parent=51 // loop_header
                %s243 = sphi 0, %s247
                %p244 = scmp.ge.s32.totalorder %s243, 1
                %s248 = sphi %s237, %s237
                %s249 = sphi %s234, %s234
              $region55: #{solver_forward_feature_major.1} parent=51 // loop_header_branch
                %246 = sbr.rel (%p244) target = $region59
              $region56: #{solver_forward_feature_major.1} parent=51 // loop_body
                %v250 = vld [vmem:[%s248] sm:$0xff]
                %251 = vst [vmem:[%s249] sm:$0xff] %v250
                %v252 = vld [vmem:[%s248 + $0x8] sm:$0xff]
                %253 = vst [vmem:[%s249 + $0x8] sm:$0xff] %v252
                %v254 = vld [vmem:[%s248 + $0x20] sm:$0xff]
                %255 = vst [vmem:[%s249 + $0x10] sm:$0xff] %v254
                %v256 = vld [vmem:[%s248 + $0x28] sm:$0xff]
                %257 = vst [vmem:[%s249 + $0x18] sm:$0xff] %v256
              $region57: #{solver_forward_feature_major.1} parent=51 // loop_footer
                %s247 = sadd.s32 1, %s243
              $region58: #{solver_forward_feature_major.1} parent=51 // loop_footer_branch
                %242 = sbr.rel target = $region54
              $region59: #{solver_forward_feature_major.1} parent=51 // loop_exit
                _
            $region52: #{solver_forward_feature_major.1} parent=47 // pred_fallthru
              _
            // Predicated region
            $region60: #{solver_forward_feature_major.1} parent=47 // pred_check
              _
            $region61: #{solver_forward_feature_major.1} parent=47 // pred_check_branch
              %259 = sbr.rel target = $region63
            $region62: #{solver_forward_feature_major.1} parent=47 // pred_region
              _
            $region63: #{solver_forward_feature_major.1} parent=47 // pred_fallthru
              _
          $region48: #{solver_forward_feature_major.1} parent=43 // pred_fallthru
            _
          %260 = vnop
        $region44: #{solver_forward_feature_major.1} parent=39 // pred_fallthru
          _
      $region40: #{solver_forward_feature_major.1} parent=5 // pred_fallthru
        _
      %p261 = scmp.le.s32.totalorder 1, %s13
      %p262 = scmp.lt.s32.totalorder %s13, 3
      %p263 = pnand %p261, %p262
      %p264 = pneg %p263
      // Predicated region
      $region64: #{solver_forward_feature_major.1} parent=5 // pred_check
        _
      $region65: #{solver_forward_feature_major.1} parent=5 // pred_check_branch
        %266 = sbr.rel (%p263) target = $region67
      $region66: #{solver_forward_feature_major.1} parent=5 // pred_region
        %s267 = ssub.s32 %s13, 1
        %s268 = sand.u32 %s26, 1
        %s269 = sand.u32 %s26, 1
        %s270 = smul.addr %s269, 32
        %s271 = scalar_lea.vmem [#allocation2], %s270
        // Predicated region
        $region68: #{solver_forward_feature_major.1} parent=66 // pred_check
          %p272 = pneg %p39
        $region69: #{solver_forward_feature_major.1} parent=66 // pred_check_branch
          %274 = sbr.rel (%p272) target = $region71
        $region70: #{solver_forward_feature_major.1} parent=66 // pred_region
          _
        $region71: #{solver_forward_feature_major.1} parent=66 // pred_fallthru
          _
        %s275 = sand.u32 %s26, 1
        %s276 = sand.u32 %s26, 1
        %s277 = smul.addr %s276, 32
        %s278 = scalar_lea.vmem [#allocation2], %s277
        %p279 = pneg %p39
        %p280 = pneg %p36
        %p281 = pneg %p60
        %p282 = pneg %p57
        %p283 = pneg %p81
        %p284 = pneg %p78
        %p285 = pneg %p102
        %p286 = pneg %p99
        %p287 = pneg %p123
        %p288 = pneg %p120
        %p289 = pneg %p144
        %p290 = pneg %p141
        %p291 = pneg %p165
        %p292 = pneg %p162
        %p293 = pneg %p191
        %p294 = pneg %p188
        %s295 = smul.u32 2, %s18
        %p296 = scmp.lt.s32.totalorder %s295, 3
        %s297 = scalar_select %p296, %s295, 3
        %s298 = smul.addr %s297, 4
        %s299 = scalar_lea.vmem %s7, %s298
        %s300 = smul.u32 2, %s18
        %s301 = smul.u32 2, %s18
        %p302 = scmp.lt.s32.totalorder %s301, 3
        %s303 = scalar_select %p302, %s301, 3
        %s304 = smul.addr %s303, 4
        %s305 = scalar_lea.vmem %s7, %s304
        %s306 = smul.u32 2, %s18
        %v307 = vld [vmem:[%s271] sm:$0xff]
        %v308 = vld [vmem:[%s271 + $0x8] sm:$0xff]
        %v309 = vld [vmem:[%s271 + $0x10] sm:$0x3f]
        %v310 = vld [vmem:[%s271 + $0x18] sm:$0x3f]
        %v311 = vld [vmem:[%s1] sm:$0xff]
        %v312 = vld [vmem:[%s1 + $0x8] sm:$0xff]
        %v313 = vld [vmem:[%s2] sm:$0xff]
        %v314 = vld [vmem:[%s2 + $0x8] sm:$0xff]
        %316 = vset.pattern.permute.xlu0 0
        %317 = vperm.xlu0 %316, %v313
        %v318 = vpop.permute.xlu0 %317
        %321 = vset.pattern.permute.xlu0 0
        %322 = vperm.xlu0 %321, %v314
        %v323 = vpop.permute.xlu0 %322
        %vm325 = vcmask 113664
        %v327 = vsel %vm325, %v311, 0
        %v330 = vsel %vm325, %v312, 0
        %vm332 = vcmask 1045504
        %v334 = vsel %vm332, %v309, 0
        %v337 = vsel %vm332, %v310, 0
        %339 = vmatprep.subr.mxu0 0.0
        %340 = vmatpush1.msra.mxu0 0.0
        %341 = vmatprep.subr.mxu0 0.0
        %342 = vmatpush1.msra.mxu0 0.0
        %343 = vmatprep.subr.mxu0 0.0
        %344 = vmatpush1.msra.mxu0 0.0
        %345 = vmatprep.subr.mxu0 0.0
        %346 = vmatpush1.msra.mxu0 0.0
        %347 = vmatprep.subr.mxu0 0.0
        %348 = vmatpush1.msra.mxu0 0.0
        %349 = vmatprep.subr.mxu0 0.0
        %350 = vmatpush1.msra.mxu0 0.0
        %351 = vmatprep.subr.mxu0 0.0
        %352 = vmatpush1.msra.mxu0 0.0
        %353 = vmatprep.subr.mxu0 0.0
        %354 = vmatpush1.msra.mxu0 0.0
        %355 = vmatprep.subr.mxu0 0.0
        %356 = vmatpush1.msra.mxu0 0.0
        %357 = vmatprep.subr.mxu0 0.0
        %358 = vmatpush1.msra.mxu0 0.0
        %359 = vmatprep.subr.mxu0 0.0
        %360 = vmatpush1.msra.mxu0 0.0
        %361 = vmatprep.subr.mxu0 0.0
        %362 = vmatpush1.msra.mxu0 0.0
        %363 = vmatprep.subr.mxu0 0.0
        %364 = vmatpush1.msra.mxu0 0.0
        %365 = vmatprep.subr.mxu0 0.0
        %366 = vmatpush1.msra.mxu0 0.0
        %367 = vmatprep.subr.mxu0 %v337
        %368 = vmatpush1.msra.mxu0 %v334
        %369 = vmatprep.subr.mxu0 %v308
        %370 = vmatpush1.msra.mxu0 %v307
        %371 = vmatprep.subr.mxu0 0.0
        %372 = vmatpush2.msra.mxu0 0.0
        %373 = vmatprep.subr.mxu0 0.0
        %374 = vmatpush2.msra.mxu0 0.0
        %375 = vmatprep.subr.mxu0 0.0
        %376 = vmatpush2.msra.mxu0 0.0
        %377 = vmatprep.subr.mxu0 0.0
        %378 = vmatpush2.msra.mxu0 0.0
        %379 = vmatprep.subr.mxu0 0.0
        %380 = vmatpush2.msra.mxu0 0.0
        %381 = vmatprep.subr.mxu0 0.0
        %382 = vmatpush2.msra.mxu0 0.0
        %383 = vmatprep.subr.mxu0 0.0
        %384 = vmatpush2.msra.mxu0 0.0
        %385 = vmatprep.subr.mxu0 0.0
        %386 = vmatpush2.msra.mxu0 0.0
        %387 = vmatprep.subr.mxu0 0.0
        %388 = vmatpush2.msra.mxu0 0.0
        %389 = vmatprep.subr.mxu0 0.0
        %390 = vmatpush2.msra.mxu0 0.0
        %391 = vmatprep.subr.mxu0 0.0
        %392 = vmatpush2.msra.mxu0 0.0
        %393 = vmatprep.subr.mxu0 0.0
        %394 = vmatpush2.msra.mxu0 0.0
        %395 = vmatprep.subr.mxu0 0.0
        %396 = vmatpush2.msra.mxu0 0.0
        %397 = vmatprep.subr.mxu0 0.0
        %398 = vmatpush2.msra.mxu0 0.0
        %399 = vmatprep.subr.mxu0 0.0
        %400 = vmatpush2.msra.mxu0 0.0
        %401 = vmatprep.subr.mxu0 0.0
        %402 = vmatpush2.msra.mxu0 0.0
        %403 = vmatprep.mubr.f32.mxu0 0.0
        %404 = vmatmul.mubr.f32.gmra.mxu0 %v327
        %v405 = vpop.f32.mrf.mxu0
        %v406 = vadd.f32 %v318, %v405
        %v407 = vpop.f32.mrf.mxu0
        %v408 = vadd.f32 %v318, %v407
        %409 = vmatprep.mubr.f32.mxu0 0.0
        %410 = vmatmul.mubr.f32.gmra.mxu0 %v330
        %v411 = vpop.f32.mrf.mxu0
        %v412 = vadd.f32 %v323, %v411
        %v413 = vpop.f32.mrf.mxu0
        %v414 = vadd.f32 %v323, %v413
        %415 = vdwg.mxu0
        %v416 = vmul.f32 %v406, 0.5
        %v417 = vmul.f32 %v408, 0.5
        %v418 = vmul.f32 %v412, 0.5
        %v419 = vmul.f32 %v414, 0.5
        %v420 = vtanh.pop %v416
        %v421 = vtanh.pop %v417
        %v422 = vtanh.pop %v418
        %v423 = vtanh.pop %v419
        %v424 = vmul.f32 %v420, 0.5
        %v425 = vmul.f32 %v421, 0.5
        %v426 = vmul.f32 %v422, 0.5
        %v427 = vmul.f32 %v423, 0.5
        %v428 = vadd.f32 %v424, 0.5
        %v429 = vadd.f32 %v425, 0.5
        %v430 = vadd.f32 %v426, 0.5
        %v431 = vadd.f32 %v427, 0.5
        %v432 = vld [vmem:[%s3] sm:$0xff]
        %v433 = vld [vmem:[%s3 + $0x8] sm:$0xff]
        %v434 = vld [vmem:[%s3 + $0x10] sm:$0xff]
        %v435 = vld [vmem:[%s3 + $0x18] sm:$0xff]
        %v436 = vld [vmem:[%s4] sm:$0xff]
        %v437 = vld [vmem:[%s4 + $0x8] sm:$0xff]
        %v438 = vld [vmem:[%s4 + $0x10] sm:$0xff]
        %v439 = vld [vmem:[%s4 + $0x18] sm:$0xff]
        %441 = vset.pattern.permute.xlu0 0
        %442 = vperm.xlu0 %441, %v436
        %v443 = vpop.permute.xlu0 %442
        %446 = vset.pattern.permute.xlu0 0
        %447 = vperm.xlu0 %446, %v437
        %v448 = vpop.permute.xlu0 %447
        %451 = vset.pattern.permute.xlu0 0
        %452 = vperm.xlu0 %451, %v438
        %v453 = vpop.permute.xlu0 %452
        %456 = vset.pattern.permute.xlu0 0
        %457 = vperm.xlu0 %456, %v439
        %v458 = vpop.permute.xlu0 %457
        %vm460 = vcmask 130048
        %v462 = vsel %vm460, %v432, 0
        %v465 = vsel %vm460, %v433, 0
        %v468 = vsel %vm460, %v434, 0
        %v471 = vsel %vm460, %v435, 0
        %473 = vmatprep.subr.mxu0 0.0
        %474 = vmatpush1.msra.mxu0 0.0
        %475 = vmatprep.subr.mxu0 0.0
        %476 = vmatpush1.msra.mxu0 0.0
        %477 = vmatprep.subr.mxu0 0.0
        %478 = vmatpush1.msra.mxu0 0.0
        %479 = vmatprep.subr.mxu0 0.0
        %480 = vmatpush1.msra.mxu0 0.0
        %481 = vmatprep.subr.mxu0 0.0
        %482 = vmatpush1.msra.mxu0 0.0
        %483 = vmatprep.subr.mxu0 0.0
        %484 = vmatpush1.msra.mxu0 0.0
        %485 = vmatprep.subr.mxu0 0.0
        %486 = vmatpush1.msra.mxu0 0.0
        %487 = vmatprep.subr.mxu0 0.0
        %488 = vmatpush1.msra.mxu0 0.0
        %489 = vmatprep.subr.mxu0 0.0
        %490 = vmatpush1.msra.mxu0 0.0
        %491 = vmatprep.subr.mxu0 0.0
        %492 = vmatpush1.msra.mxu0 0.0
        %493 = vmatprep.subr.mxu0 0.0
        %494 = vmatpush1.msra.mxu0 0.0
        %495 = vmatprep.subr.mxu0 0.0
        %496 = vmatpush1.msra.mxu0 0.0
        %497 = vmatprep.subr.mxu0 0.0
        %498 = vmatpush1.msra.mxu0 0.0
        %499 = vmatprep.subr.mxu0 0.0
        %500 = vmatpush1.msra.mxu0 0.0
        %501 = vmatprep.subr.mxu0 %v431
        %502 = vmatpush1.msra.mxu0 %v430
        %503 = vmatprep.subr.mxu0 %v429
        %504 = vmatpush1.msra.mxu0 %v428
        %505 = vmatprep.subr.mxu0 0.0
        %506 = vmatpush2.msra.mxu0 0.0
        %507 = vmatprep.subr.mxu0 0.0
        %508 = vmatpush2.msra.mxu0 0.0
        %509 = vmatprep.subr.mxu0 0.0
        %510 = vmatpush2.msra.mxu0 0.0
        %511 = vmatprep.subr.mxu0 0.0
        %512 = vmatpush2.msra.mxu0 0.0
        %513 = vmatprep.subr.mxu0 0.0
        %514 = vmatpush2.msra.mxu0 0.0
        %515 = vmatprep.subr.mxu0 0.0
        %516 = vmatpush2.msra.mxu0 0.0
        %517 = vmatprep.subr.mxu0 0.0
        %518 = vmatpush2.msra.mxu0 0.0
        %519 = vmatprep.subr.mxu0 0.0
        %520 = vmatpush2.msra.mxu0 0.0
        %521 = vmatprep.subr.mxu0 0.0
        %522 = vmatpush2.msra.mxu0 0.0
        %523 = vmatprep.subr.mxu0 0.0
        %524 = vmatpush2.msra.mxu0 0.0
        %525 = vmatprep.subr.mxu0 0.0
        %526 = vmatpush2.msra.mxu0 0.0
        %527 = vmatprep.subr.mxu0 0.0
        %528 = vmatpush2.msra.mxu0 0.0
        %529 = vmatprep.subr.mxu0 0.0
        %530 = vmatpush2.msra.mxu0 0.0
        %531 = vmatprep.subr.mxu0 0.0
        %532 = vmatpush2.msra.mxu0 0.0
        %533 = vmatprep.subr.mxu0 0.0
        %534 = vmatpush2.msra.mxu0 0.0
        %535 = vmatprep.subr.mxu0 0.0
        %536 = vmatpush2.msra.mxu0 0.0
        %537 = vmatprep.mubr.f32.mxu0 0.0
        %538 = vmatmul.mubr.f32.gmra.mxu0 %v462
        %v539 = vpop.f32.mrf.mxu0
        %v540 = vadd.f32 %v443, %v539
        %v541 = vpop.f32.mrf.mxu0
        %v542 = vadd.f32 %v443, %v541
        %543 = vmatprep.mubr.f32.mxu0 0.0
        %544 = vmatmul.mubr.f32.gmra.mxu0 %v465
        %v545 = vpop.f32.mrf.mxu0
        %v546 = vadd.f32 %v448, %v545
        %v547 = vpop.f32.mrf.mxu0
        %v548 = vadd.f32 %v448, %v547
        %549 = vmatprep.mubr.f32.mxu0 0.0
        %550 = vmatmul.mubr.f32.gmra.mxu0 %v468
        %v551 = vpop.f32.mrf.mxu0
        %v552 = vadd.f32 %v453, %v551
        %v553 = vpop.f32.mrf.mxu0
        %v554 = vadd.f32 %v453, %v553
        %555 = vmatprep.mubr.f32.mxu0 0.0
        %556 = vmatmul.mubr.f32.gmra.mxu0 %v471
        %v557 = vpop.f32.mrf.mxu0
        %v558 = vadd.f32 %v458, %v557
        %v559 = vpop.f32.mrf.mxu0
        %v560 = vadd.f32 %v458, %v559
        %561 = vdwg.mxu0
        %v562 = vmul.f32 %v540, 0.5
        %v563 = vmul.f32 %v542, 0.5
        %v564 = vmul.f32 %v546, 0.5
        %v565 = vmul.f32 %v548, 0.5
        %v566 = vmul.f32 %v552, 0.5
        %v567 = vmul.f32 %v554, 0.5
        %v568 = vmul.f32 %v558, 0.5
        %v569 = vmul.f32 %v560, 0.5
        %v570 = vtanh.pop %v562
        %v571 = vtanh.pop %v563
        %v572 = vtanh.pop %v564
        %v573 = vtanh.pop %v565
        %v574 = vtanh.pop %v566
        %v575 = vtanh.pop %v567
        %v576 = vtanh.pop %v568
        %v577 = vtanh.pop %v569
        %v578 = vmul.f32 %v570, 0.5
        %v579 = vmul.f32 %v571, 0.5
        %v580 = vmul.f32 %v572, 0.5
        %v581 = vmul.f32 %v573, 0.5
        %v582 = vmul.f32 %v574, 0.5
        %v583 = vmul.f32 %v575, 0.5
        %v584 = vmul.f32 %v576, 0.5
        %v585 = vmul.f32 %v577, 0.5
        %v586 = vadd.f32 %v578, 0.5
        %v587 = vadd.f32 %v579, 0.5
        %v588 = vadd.f32 %v580, 0.5
        %v589 = vadd.f32 %v581, 0.5
        %v590 = vadd.f32 %v582, 0.5
        %v591 = vadd.f32 %v583, 0.5
        %v592 = vadd.f32 %v584, 0.5
        %v593 = vadd.f32 %v585, 0.5
        %v594 = vld [vmem:[%s5] sm:$0xf]
        %v595 = vld [vmem:[%s6] sm:$0xf]
        %597 = vset.pattern.permute.xlu0 0
        %598 = vperm.xlu0 %597, %v595
        %v599 = vpop.permute.xlu0 %598
        %vm601 = vcmask 261120
        %v603 = vsel %vm601, %v594, 0
        %605 = vmatprep.subr.mxu0 0.0
        %606 = vmatpush1.msra.mxu0 0.0
        %607 = vmatprep.subr.mxu0 0.0
        %608 = vmatpush1.msra.mxu0 0.0
        %609 = vmatprep.subr.mxu0 0.0
        %610 = vmatpush1.msra.mxu0 0.0
        %611 = vmatprep.subr.mxu0 0.0
        %612 = vmatpush1.msra.mxu0 0.0
        %613 = vmatprep.subr.mxu0 0.0
        %614 = vmatpush1.msra.mxu0 0.0
        %615 = vmatprep.subr.mxu0 0.0
        %616 = vmatpush1.msra.mxu0 0.0
        %617 = vmatprep.subr.mxu0 0.0
        %618 = vmatpush1.msra.mxu0 0.0
        %619 = vmatprep.subr.mxu0 0.0
        %620 = vmatpush1.msra.mxu0 0.0
        %621 = vmatprep.subr.mxu0 0.0
        %622 = vmatpush1.msra.mxu0 0.0
        %623 = vmatprep.subr.mxu0 0.0
        %624 = vmatpush1.msra.mxu0 0.0
        %625 = vmatprep.subr.mxu0 0.0
        %626 = vmatpush1.msra.mxu0 0.0
        %627 = vmatprep.subr.mxu0 0.0
        %628 = vmatpush1.msra.mxu0 0.0
        %629 = vmatprep.subr.mxu0 %v593
        %630 = vmatpush1.msra.mxu0 %v592
        %631 = vmatprep.subr.mxu0 %v591
        %632 = vmatpush1.msra.mxu0 %v590
        %633 = vmatprep.subr.mxu0 %v589
        %634 = vmatpush1.msra.mxu0 %v588
        %635 = vmatprep.subr.mxu0 %v587
        %636 = vmatpush1.msra.mxu0 %v586
        %637 = vmatprep.subr.mxu0 0.0
        %638 = vmatpush2.msra.mxu0 0.0
        %639 = vmatprep.subr.mxu0 0.0
        %640 = vmatpush2.msra.mxu0 0.0
        %641 = vmatprep.subr.mxu0 0.0
        %642 = vmatpush2.msra.mxu0 0.0
        %643 = vmatprep.subr.mxu0 0.0
        %644 = vmatpush2.msra.mxu0 0.0
        %645 = vmatprep.subr.mxu0 0.0
        %646 = vmatpush2.msra.mxu0 0.0
        %647 = vmatprep.subr.mxu0 0.0
        %648 = vmatpush2.msra.mxu0 0.0
        %649 = vmatprep.subr.mxu0 0.0
        %650 = vmatpush2.msra.mxu0 0.0
        %651 = vmatprep.subr.mxu0 0.0
        %652 = vmatpush2.msra.mxu0 0.0
        %653 = vmatprep.subr.mxu0 0.0
        %654 = vmatpush2.msra.mxu0 0.0
        %655 = vmatprep.subr.mxu0 0.0
        %656 = vmatpush2.msra.mxu0 0.0
        %657 = vmatprep.subr.mxu0 0.0
        %658 = vmatpush2.msra.mxu0 0.0
        %659 = vmatprep.subr.mxu0 0.0
        %660 = vmatpush2.msra.mxu0 0.0
        %661 = vmatprep.subr.mxu0 0.0
        %662 = vmatpush2.msra.mxu0 0.0
        %663 = vmatprep.subr.mxu0 0.0
        %664 = vmatpush2.msra.mxu0 0.0
        %665 = vmatprep.subr.mxu0 0.0
        %666 = vmatpush2.msra.mxu0 0.0
        %667 = vmatprep.subr.mxu0 0.0
        %668 = vmatpush2.msra.mxu0 0.0
        %669 = vmatprep.mubr.f32.mxu0 0.0
        %670 = vmatmul.mubr.f32.gmra.mxu0 %v603
        %v671 = vpop.f32.mrf.mxu0
        %v672 = vadd.f32 %v599, %v671
        %v673 = vpop.f32.mrf.mxu0
        %v674 = vadd.f32 %v599, %v673
        %675 = vdwg.mxu0
        %vm676 = vcmask 1043456
        %v677 = vsel %vm676, %v672, -inf
        %v678 = vrot.slane %v677, 4
        %v679 = vmax.f32 %v677, %v678
        %v680 = vrot.slane %v679, 2
        %v681 = vmax.f32 %v679, %v680
        %v682 = vrot.slane %v681, 1
        %v683 = vmax.f32 %v681, %v682
        %v684 = vsel %vm676, %v674, -inf
        %v685 = vrot.slane %v684, 4
        %v686 = vmax.f32 %v684, %v685
        %v687 = vrot.slane %v686, 2
        %v688 = vmax.f32 %v686, %v687
        %v689 = vrot.slane %v688, 1
        %v690 = vmax.f32 %v688, %v689
        %v691 = vsub.f32 %v672, %v683
        %v692 = vsub.f32 %v674, %v690
        %v693 = vmul.f32 %v691, 1.442695
        %v694 = vpow.pop %v693
        %v695 = vmul.f32 %v692, 1.442695
        %v696 = vpow.pop %v695
        %v697 = vsel %vm676, %v694, 0.0
        %v698 = vrot.slane %v697, 4
        %v699 = vadd.f32 %v697, %v698
        %v700 = vrot.slane %v699, 2
        %v701 = vadd.f32 %v699, %v700
        %v702 = vrot.slane %v701, 1
        %v703 = vadd.f32 %v701, %v702
        %v704 = vsel %vm676, %v696, 0.0
        %v705 = vrot.slane %v704, 4
        %v706 = vadd.f32 %v704, %v705
        %v707 = vrot.slane %v706, 2
        %v708 = vadd.f32 %v706, %v707
        %v709 = vrot.slane %v708, 1
        %v710 = vadd.f32 %v708, %v709
        %v711 = vrcp.pop %v703
        %v712 = vmul.f32 %v694, %v711
        %v713 = vrcp.pop %v710
        %v714 = vmul.f32 %v696, %v713
        %v717 = vcombine.low %v712, %v714
        %719 = vst [vmem:[%s305] sm:$0xff] %v717
        %s720 = smul.u32 2, %s18
        %p721 = scmp.lt.s32.totalorder %s720, 3
        %s722 = scalar_select %p721, %s720, 3
        %s723 = smul.addr %s722, 4
        %s724 = scalar_lea.vmem %s7, %s723
        // Predicated region
        $region72: #{solver_forward_feature_major.1} parent=66 // pred_check
          %p725 = pneg %p188
        $region73: #{solver_forward_feature_major.1} parent=66 // pred_check_branch
          %727 = sbr.rel (%p725) target = $region75
        $region74: #{solver_forward_feature_major.1} parent=66 // pred_region
          %s728 = smul.u32 2, %s18
        $region75: #{solver_forward_feature_major.1} parent=66 // pred_fallthru
          _
      $region67: #{solver_forward_feature_major.1} parent=5 // pred_fallthru
        _
      %p729 = scmp.le.s32.totalorder 2, %s13
      // Predicated region
      $region76: #{solver_forward_feature_major.1} parent=5 // pred_check
        %p730 = pneg %p729
      $region77: #{solver_forward_feature_major.1} parent=5 // pred_check_branch
        %732 = sbr.rel (%p730) target = $region79
      $region78: #{solver_forward_feature_major.1} parent=5 // pred_region
        %s733 = ssub.s32 %s13, 2
        // Predicated region
        $region80: #{solver_forward_feature_major.1} parent=78 // pred_check
          %p734 = pneg %p194
        $region81: #{solver_forward_feature_major.1} parent=78 // pred_check_branch
          %736 = sbr.rel (%p734) target = $region83
        $region82: #{solver_forward_feature_major.1} parent=78 // pred_region
          %s737 = smul.u32 2, %s19
          %p738 = scmp.lt.s32.totalorder %s737, 3
          %s739 = scalar_select %p738, %s737, 3
          %s740 = smul.addr %s739, 4
          %s741 = scalar_lea.vmem %s7, %s740
        $region83: #{solver_forward_feature_major.1} parent=78 // pred_fallthru
          _
      $region79: #{solver_forward_feature_major.1} parent=5 // pred_fallthru
        _
    $region6: #{solver_forward_feature_major.1} parent=1 // loop_footer
      %s17 = sadd.s32 1, %s13
    $region7: #{solver_forward_feature_major.1} parent=1 // loop_footer_branch
      %12 = sbr.rel target = $region3
    $region8: #{solver_forward_feature_major.1} parent=1 // loop_exit
      _

</llo_original>
